<compile_context>
chip_gen: v7x
topology: tpu7x:2x2x1
jax: 0.10.0
libtpu: 0.0.40
codegen_flags: <defaults>
</compile_context>

<pallas_src>
import functools

import jax
import jax.numpy as jnp
from jax import lax
from jax.experimental import pallas as pl
from jax.experimental.pallas import tpu as pltpu


def _round_up(x, m):
    return (x + m - 1) // m * m


def _choose_row_tile(n, max_tile):
    """Pick (tn, n_pad): big tiles, and avoid row padding when possible."""
    n8 = _round_up(n, 8)
    if n8 <= max_tile:
        return n8, n8
    # largest multiple-of-8 divisor of n8 in [256, max_tile] -> zero padding
    for t in range(max_tile - max_tile % 8, 255, -8):
        if n8 % t == 0:
            return t, n8
    t = min(512, max_tile)
    return t, _round_up(n8, t)


def _feature_embed_kernel(seed_ref, idx_ref, emb_ref, out_ref, *, p,
                          apply_dropout):
    """One grid step: gather `tn` rows via one-hot matmul, fuse dropout, store."""
    tn, e = out_ref.shape
    v = emb_ref.shape[0]

    # ---- embedding gather on the MXU ---------------------------------------
    ids = idx_ref[...]                                    # (tn, 1) int32
    cols = lax.broadcasted_iota(jnp.int32, (tn, v), 1)    # (tn, V)
    one_hot = (cols == ids).astype(jnp.float32)           # exact 0/1 weights
    g = jnp.dot(one_hot, emb_ref[...],
                preferred_element_type=jnp.float32)       # (tn, E)

    # ---- dropout fused before the single store ------------------------------
    if apply_dropout and p > 0.0:
        i = pl.program_id(0)
        row = lax.broadcasted_iota(jnp.int32, (tn, e), 0)
        col = lax.broadcasted_iota(jnp.int32, (tn, e), 1)
        elem = (i * tn + row) * e + col                   # global element id
        x = elem.astype(jnp.uint32) + (
            seed_ref[0].astype(jnp.uint32) * jnp.uint32(0x9E3779B9))
        # lowbias32 integer mix -> stateless per-element uniform 32-bit stream
        x = x ^ (x >> 16)
        x = x * jnp.uint32(0x7FEB352D)
        x = x ^ (x >> 15)
        x = x * jnp.uint32(0x846CA68B)
        x = x ^ (x >> 16)
        thr = jnp.uint32(min(int(round(p * (2 ** 32))), 2 ** 32 - 1))
        keep = x >= thr                                   # P(keep) = 1 - p
        scale = jnp.float32(1.0 / (1.0 - p))
        g = jnp.where(keep, g * scale, jnp.float32(0.0))

    out_ref[...] = g.astype(out_ref.dtype)


def feature_embedding(indices, emb_table, seed=0, *, dropout_p=0.1,
                      training=True):
    """Pallas equivalent of FeatureEmbedding.forward.

    indices   : [B, S] int32
    emb_table : [V, E] float32
    returns   : [B, S, E] float32
    """
    assert 0.0 <= dropout_p < 1.0
    B, S = indices.shape
    V, E = emb_table.shape
    N = B * S

    e_vmem = _round_up(E, 128)            # lane-padded VMEM width (layout only)
    # cap the row tile so a double-buffered output block stays modest in VMEM
    max_tile = min(1024, max(256, ((4 << 20) // (e_vmem * 4)) // 8 * 8))
    tn, n_pad = _choose_row_tile(N, max_tile)
    grid = n_pad // tn

    idx_col = indices.reshape(N).astype(jnp.int32)
    if n_pad != N:
        idx_col = jnp.pad(idx_col, (0, n_pad - N))
    idx_col = idx_col.reshape(n_pad, 1)
    seed_arr = jnp.asarray([seed], dtype=jnp.int32)
    table = emb_table.astype(jnp.float32)

    # VMEM budget (lane-padded): resident table + double-buffered idx/out blocks.
    table_bytes = _round_up(V, 8) * e_vmem * 4
    assert table_bytes <= (8 << 20), (
        "embedding table too large for resident-VMEM plan; use HBM DMA gather")
    out_block_bytes = tn * e_vmem * 4
    idx_block_bytes = tn * 128 * 4
    needed = 2 * (table_bytes + out_block_bytes + idx_block_bytes) + (2 << 20)
    vmem_limit = min(max(needed, 8 << 20), 48 << 20)

    kernel = functools.partial(_feature_embed_kernel, p=float(dropout_p),
                               apply_dropout=bool(training))

    out_flat = pl.pallas_call(
        kernel,
        out_shape=jax.ShapeDtypeStruct((n_pad, E), jnp.float32),
        grid_spec=pltpu.PrefetchScalarGridSpec(
            num_scalar_prefetch=1,                     # seed -> SMEM
            grid=(grid,),
            in_specs=[
                # index column block for this tile
                pl.BlockSpec((tn, 1), lambda i, sd: (i, 0)),
                # whole embedding table, resident every step (constant block)
                pl.BlockSpec((V, E), lambda i, sd: (0, 0)),
            ],
            out_specs=pl.BlockSpec((tn, E), lambda i, sd: (i, 0)),
        ),
        compiler_params=pltpu.CompilerParams(
            dimension_semantics=("parallel",),         # stateless RNG -> safe
            vmem_limit_bytes=vmem_limit),
    )(seed_arr, idx_col, table)

    if n_pad != N:
        out_flat = out_flat[:N]
    return out_flat.reshape(B, S, E)


def make_embedding_table(key, vocab_size, embedding_size):
    """Deterministic init mirroring random_embedding(): U(-scale, scale)."""
    scale = jnp.sqrt(3.0 / embedding_size)
    return jax.random.uniform(key, (vocab_size, embedding_size),
                              dtype=jnp.float32, minval=-scale, maxval=scale)


if __name__ == "__main__":
    VOCAB = 20
    EMB = 32
    B, S = 2, 8
    DROPOUT = 0.1

    root = jax.random.PRNGKey(0)
    k_emb, k_idx = jax.random.split(root)

    emb_table = make_embedding_table(k_emb, VOCAB, EMB)
    x = jax.random.randint(k_idx, (B, S), 0, VOCAB, dtype=jnp.int32)

    ref = jnp.take(emb_table, x.reshape(-1), axis=0).reshape(B, S, EMB)

    # eval-mode pass (dropout = identity) -> must match the pure-JAX gather
    y_eval = feature_embedding(x, emb_table, seed=0, dropout_p=DROPOUT,
                               training=False)
    y_eval = jax.block_until_ready(y_eval)
    assert y_eval.shape == (B, S, EMB)
    assert jnp.allclose(y_eval, ref, atol=1e-6), "embedding gather mismatch"

    # training-mode pass: kept elements must equal ref / (1 - p), dropped are 0
    y_train = feature_embedding(x, emb_table, seed=123, dropout_p=DROPOUT,
                                training=True)
    y_train = jax.block_until_ready(y_train)
    assert y_train.shape == (B, S, EMB)
    scale = 1.0 / (1.0 - DROPOUT)
    kept = y_train != 0
    assert jnp.allclose(jnp.where(kept, y_train, 0.0),
                        jnp.where(kept, ref * scale, 0.0), atol=1e-5), \
        "dropout scaling mismatch"

    print("KERNEL_OK")
</pallas_src>

<mosaic_0001>
module attributes {stable_mosaic.version = 11 : i64} {
  func.func @_feature_embed_kernel(%arg0: i32, %arg1: memref<1xi32, #tpu.memory_space<smem>>, %arg2: memref<16x1xi32, #tpu.memory_space<vmem>>, %arg3: memref<20x32xf32, #tpu.memory_space<vmem>>, %arg4: memref<16x32xf32, #tpu.memory_space<vmem>>) attributes {dimension_semantics = [#tpu.dimension_semantics<parallel>], iteration_bounds = array<i64: 1>, scalar_prefetch = 1 : i64, scratch_operands = 0 : i64, tpu.core_type = #tpu.core_type<tc>, window_params = [{transform_indices = @transform_0, window_bounds = array<i64: 16, 1>}, {pipeline_mode = #tpu.pipeline_mode<synchronous>, transform_indices = @transform_1, window_bounds = array<i64: 20, 32>}, {transform_indices = @transform_2, window_bounds = array<i64: 16, 32>}]} {
    %c0 = arith.constant 0 : index
    %c0_0 = arith.constant 0 : index
    %0 = vector.load %arg2[%c0, %c0_0] : memref<16x1xi32, #tpu.memory_space<vmem>>, vector<16x1xi32>
    %1 = tpu.iota {dimensions = array<i32: 1>} : vector<16x20xi32>
    %2 = vector.broadcast %0 : vector<16x1xi32> to vector<16x20xi32>
    %3 = arith.cmpi eq, %1, %2 : vector<16x20xi32>
    %4 = arith.extui %3 : vector<16x20xi1> to vector<16x20xi32>
    %5 = arith.sitofp %4 : vector<16x20xi32> to vector<16x20xf32>
    %c0_1 = arith.constant 0 : index
    %c0_2 = arith.constant 0 : index
    %6 = vector.load %arg3[%c0_1, %c0_2] : memref<20x32xf32, #tpu.memory_space<vmem>>, vector<20x32xf32>
    %cst = arith.constant dense<0.000000e+00> : vector<16x32xf32>
    %7 = tpu.matmul %5, %6, %cst {dimension_numbers = #tpu.dot_dimension_numbers<[1], [0], [0], [1], [0, 0, 1, 1], [], []>} : vector<16x20xf32>, vector<20x32xf32>, vector<16x32xf32> -> vector<16x32xf32>
    %c0_3 = arith.constant 0 : index
    %c0_4 = arith.constant 0 : index
    %8 = vector.load %arg4[%c0_3, %c0_4] : memref<16x32xf32, #tpu.memory_space<vmem>>, vector<16x32xf32>
    tpu.vector_store %arg4[%c0_3, %c0_4], %7 {strides = array<i32>} : memref<16x32xf32, #tpu.memory_space<vmem>>, vector<16x32xf32>,
    return
  }
  func.func @transform_0(%arg0: i32, %arg1: memref<1xi32, #tpu.memory_space<smem>>) -> (i32, i32) {
    %c0_i32 = arith.constant 0 : i32
    %c0_i32_0 = arith.constant 0 : i32
    return %arg0, %c0_i32 : i32, i32
  }
  func.func @transform_1(%arg0: i32, %arg1: memref<1xi32, #tpu.memory_space<smem>>) -> (i32, i32) {
    %c0_i32 = arith.constant 0 : i32
    %c0_i32_0 = arith.constant 0 : i32
    %c0_i32_1 = arith.constant 0 : i32
    return %c0_i32, %c0_i32_0 : i32, i32
  }
  func.func @transform_2(%arg0: i32, %arg1: memref<1xi32, #tpu.memory_space<smem>>) -> (i32, i32) {
    %c0_i32 = arith.constant 0 : i32
    %c0_i32_0 = arith.constant 0 : i32
    return %arg0, %c0_i32 : i32, i32
  }
}

</mosaic_0001>

<llo_original>
// kernel: tpu_custom_call.1
$region0: #{tpu_custom_call.1}
  #allocation0 [shape = 'u32[]', space=smem, size = 0x4, offset = 0x4, fixed_abs, tag = 'smem constant byte address 0x4 - core index']
  #allocation1 [shape = 'u32[144,128]{1,0:T(1,128)}', space=vmem, size = 0x12000, scoped, tag = 'internal scratch']
  #allocation2 [shape = 's32[1]{0}', space=sflag, size = 0x4, scoped, tag = 'scoped memory for tpu_custom_call.1']
  #allocation3 [shape = 's32[1]{0:T(128)S(6)}', space=smem, size = 0x200, scoped, tag = 'prefetched SMEM operand 0']
  %s0 = inlined_call_operand.<no memory space> [shape: s32[1], index: 0, kind: input, shape index: {}]
  %s1 = inlined_call_operand.vmem [shape: s32[16,1], index: 1, kind: input, shape index: {}]
  %s2 = inlined_call_operand.vmem [shape: f32[20,32], index: 2, kind: input, shape index: {}]
  %s3 = inlined_call_operand.hbm [shape: f32[16,32], index: 3, kind: output, shape index: {}]
  %s4 = sld [smem:[#allocation0]]
  $region18: #{tpu_custom_call.1} parent=0
    _
  %s6 = ssub.s32 1, %s4
  %s7 = scalar_select 0, %s6, %s4
  %8 = sst [smem:[#allocation3]] %s0
  $region1: #{tpu_custom_call.1} parent=0
    #allocation4 [shape = 'u8[8192]{0}', space=vmem, size = 0x2000, scoped, tag = 'output window, operand 0, single buffered']
    #allocation5 [shape = 's32[1]{0}', space=sflag, size = 0x4, scoped, tag = 'scoped memory for tpu_custom_call.1']
    %9 = vsyncpa [#allocation5], 0
    // Predicated region
    $region2: #{tpu_custom_call.1} parent=1 // pred_check
      _
    $region3: #{tpu_custom_call.1} parent=1 // pred_check_branch
      %11 = sbr.rel (0) target = $region5
    $region4: #{tpu_custom_call.1} parent=1 // pred_region
      _
    $region5: #{tpu_custom_call.1} parent=1 // pred_fallthru
      _
    // Predicated region
    $region6: #{tpu_custom_call.1} parent=1 // pred_check
      _
    $region7: #{tpu_custom_call.1} parent=1 // pred_check_branch
      %13 = sbr.rel (0) target = $region9
    $region8: #{tpu_custom_call.1} parent=1 // pred_region
      _
    $region9: #{tpu_custom_call.1} parent=1 // pred_fallthru
      _
    %v14 = vld [vmem:[%s1] sm:$0xff]
    %v15 = vld [vmem:[%s1 + $0x8] sm:$0xff]
    %v16 = vlaneseq
    %v17 = vand.u32 %v16, 127
    %18 = vset.pattern.permute.xlu0 0
    %19 = vperm.xlu0 %18, %v14
    %v20 = vpop.permute.xlu0 %19
    %21 = vset.pattern.permute.xlu0 0
    %22 = vperm.xlu0 %21, %v15
    %v23 = vpop.permute.xlu0 %22
    %vm24 = vcmp.eq.s32.totalorder %v17, %v20
    %vm25 = vcmp.eq.s32.totalorder %v17, %v23
    %v26 = vsel %vm24, 1, 0
    %v27 = vsel %vm25, 1, 0
    %v28 = vcvt.s32.f32 %v26
    %v29 = vcvt.s32.f32 %v27
    %v30 = vld [vmem:[%s2] sm:$0xff]
    %v31 = vld [vmem:[%s2 + $0x8] sm:$0xff]
    %v32 = vld [vmem:[%s2 + $0x10] sm:$0xf]
    %vm33 = vcmask 162816
    %v35 = vsel %vm33, %v28, 0
    %v38 = vsel %vm33, %v29, 0
    %vm40 = vcmask 1043456
    %v42 = vsel %vm40, %v32, 0
    %44 = vmatprep.subr.mxu0 0.0
    %45 = vmatpush1.msra.mxu0 %v30
    %46 = vmatprep.subr.mxu0 0.0
    %47 = vmatpush1.msra.mxu0 %v31
    %48 = vmatprep.subr.mxu0 0.0
    %49 = vmatpush1.msra.mxu0 %v42
    %50 = vmatprep.subr.mxu0 0.0
    %51 = vmatpush1.msra.mxu0 0.0
    %52 = vmatprep.subr.mxu0 0.0
    %53 = vmatpush1.msra.mxu0 0.0
    %54 = vmatprep.subr.mxu0 0.0
    %55 = vmatpush1.msra.mxu0 0.0
    %56 = vmatprep.subr.mxu0 0.0
    %57 = vmatpush1.msra.mxu0 0.0
    %58 = vmatprep.subr.mxu0 0.0
    %59 = vmatpush1.msra.mxu0 0.0
    %60 = vmatprep.subr.mxu0 0.0
    %61 = vmatpush1.msra.mxu0 0.0
    %62 = vmatprep.subr.mxu0 0.0
    %63 = vmatpush1.msra.mxu0 0.0
    %64 = vmatprep.subr.mxu0 0.0
    %65 = vmatpush1.msra.mxu0 0.0
    %66 = vmatprep.subr.mxu0 0.0
    %67 = vmatpush1.msra.mxu0 0.0
    %68 = vmatprep.subr.mxu0 0.0
    %69 = vmatpush1.msra.mxu0 0.0
    %70 = vmatprep.subr.mxu0 0.0
    %71 = vmatpush1.msra.mxu0 0.0
    %72 = vmatprep.subr.mxu0 0.0
    %73 = vmatpush1.msra.mxu0 0.0
    %74 = vmatprep.subr.mxu0 0.0
    %75 = vmatpush1.msra.mxu0 0.0
    %76 = vmatprep.subr.mxu0 0.0
    %77 = vmatpush1.msra.mxu0 0.0
    %78 = vmatprep.subr.mxu0 0.0
    %79 = vmatpush1.msra.mxu0 0.0
    %80 = vmatprep.subr.mxu0 0.0
    %81 = vmatpush1.msra.mxu0 0.0
    %82 = vmatprep.subr.mxu0 0.0
    %83 = vmatpush1.msra.mxu0 0.0
    %84 = vmatprep.subr.mxu0 0.0
    %85 = vmatpush1.msra.mxu0 0.0
    %86 = vmatprep.subr.mxu0 0.0
    %87 = vmatpush1.msra.mxu0 0.0
    %88 = vmatprep.subr.mxu0 0.0
    %89 = vmatpush1.msra.mxu0 0.0
    %90 = vmatprep.subr.mxu0 0.0
    %91 = vmatpush1.msra.mxu0 0.0
    %92 = vmatprep.subr.mxu0 0.0
    %93 = vmatpush1.msra.mxu0 0.0
    %94 = vmatprep.subr.mxu0 0.0
    %95 = vmatpush1.msra.mxu0 0.0
    %96 = vmatprep.subr.mxu0 0.0
    %97 = vmatpush1.msra.mxu0 0.0
    %98 = vmatprep.subr.mxu0 0.0
    %99 = vmatpush1.msra.mxu0 0.0
    %100 = vmatprep.subr.mxu0 0.0
    %101 = vmatpush1.msra.mxu0 0.0
    %102 = vmatprep.subr.mxu0 0.0
    %103 = vmatpush1.msra.mxu0 0.0
    %104 = vmatprep.subr.mxu0 0.0
    %105 = vmatpush1.msra.mxu0 0.0
    %106 = vmatprep.subr.mxu0 0.0
    %107 = vmatpush1.msra.mxu0 0.0
    %108 = vmatprep.mubr.f32.mxu0 0.0
    %109 = vmatmul.mubr.f32.gmra.mrb[0].mxu0 %v35
    %v110 = vpop.f32.mrb[0].mxu0
    %v111 = vadd.f32 0.0, %v110
    %v112 = vpop.f32.mrb[0].mxu0
    %113 = vmatprep.mubr.f32.mxu0 0.0
    %114 = vmatmul.mubr.f32.gmra.mrb[0].mxu0 %v38
    %v115 = vpop.f32.mrb[0].mxu0
    %v116 = vadd.f32 0.0, %v115
    %v117 = vpop.f32.mrb[0].mxu0
    %118 = vdwg.mxu0
    %vm119 = vcmask 261120
    %120 = vst.msk [vmem:[#allocation4] sm:$0xff] %vm119, %v111
    %121 = vst.msk [vmem:[#allocation4 + $0x8] sm:$0xff] %vm119, %v116
    // Predicated region
    $region10: #{tpu_custom_call.1} parent=1 // pred_check
      _
    $region11: #{tpu_custom_call.1} parent=1 // pred_check_branch
      %123 = sbr.rel (0) target = $region13
    $region12: #{tpu_custom_call.1} parent=1 // pred_region
      %s125 = ssub.s32 256, 256
      %126 = vsyncadd [#allocation5], %s125
      %s127 = sshll.u32 [#allocation4], 4
      %s128 = int_to_ptr.vmem [resolvable:$true] %s127
      %133 = dma.vmem_to_hbm [thread:$0]  %s128, 256, %s3, [#allocation5], 128, 128, 8
    $region13: #{tpu_custom_call.1} parent=1 // pred_fallthru
      _
    // Predicated region
    $region14: #{tpu_custom_call.1} parent=1 // pred_check
      _
    $region15: #{tpu_custom_call.1} parent=1 // pred_check_branch
      %135 = sbr.rel (0) target = $region17
    $region16: #{tpu_custom_call.1} parent=1 // pred_region
      %136 = dma.done [#allocation5], 256
    $region17: #{tpu_custom_call.1} parent=1 // pred_fallthru
      _
    %137 = vsyncpa [#allocation5], 1

</llo_original>
